<compile_context>
chip_gen: v7x
topology: tpu7x:2x2x1
jax: 0.10.0
libtpu: 0.0.40
codegen_flags: <defaults>
</compile_context>

<pallas_src>
import jax
import jax.numpy as jnp
from jax.experimental import pallas as pl
from jax.experimental.pallas import tpu as pltpu

_LANES = 128                    # vreg lane width: keep the kernel's last dim lane-dense
_TARGET_BLOCK_BYTES = 4 << 20   # ~4 MiB per block buffer, constant across dtypes
_SINGLE_BLOCK_ROWS = 1024       # <= this many (rows, 128) rows -> one full-extent block
_SMALL_RAGGED_BYTES = 2 << 20   # ragged arrays up to 2 MiB -> one full-array block


def _copy_kernel(x_ref, o_ref):
    # Pure copy of the current tile (identity).
    o_ref[...] = x_ref[...]


def _compiler_params(block_bytes, parallel_axes=1):
    # Double-buffered in + out buffers of one block each, plus margin.
    vmem_limit = max(8 << 20, int(4 * block_bytes + (2 << 20)))
    sem = ("parallel",) * parallel_axes if parallel_axes else None
    return pltpu.CompilerParams(
        dimension_semantics=sem,
        vmem_limit_bytes=vmem_limit,
    )


def _cost(n_bytes):
    # Bandwidth-only op: one read + one write of the whole array.
    return pl.CostEstimate(flops=0, transcendentals=0, bytes_accessed=2 * n_bytes)


@jax.jit
def identity_map(x, *args, **kwargs):
    """Pallas implementation of IdentityMap.forward: returns x unchanged."""
    del args, kwargs  # IdentityMap ignores everything except x.
    n = x.size
    if n == 0:
        return x  # Degenerate input: nothing to copy.

    itemsize = jnp.dtype(x.dtype).itemsize
    n_bytes = n * itemsize

    if n % _LANES == 0:
        # Main path (all realistic LLaVA shapes): free reshape to a lane-dense
        # (rows, 128) slab so every store is a full-width vst.
        rows = n // _LANES
        x2d = x.reshape(rows, _LANES)

        if rows <= _SINGLE_BLOCK_ROWS:
            # Tiny array: one full-extent block (block_shape == array shape, so
            # the (8, 128) divisibility rule does not apply).
            tm = rows
        else:
            # dtype-scaled block: constant ~4 MiB of bytes per block.
            tm = max(8, (_TARGET_BLOCK_BYTES // (_LANES * itemsize)) // 8 * 8)
            # Keep >= 2 grid steps so v7x's two TensorCores both get work.
            half_rows = (((rows + 1) // 2) + 7) // 8 * 8
            tm = min(tm, half_rows)

        block_bytes = tm * _LANES * itemsize
        grid = (pl.cdiv(rows, tm),)  # ragged final block is masked by Pallas
        out2d = pl.pallas_call(
            _copy_kernel,
            out_shape=jax.ShapeDtypeStruct((rows, _LANES), x.dtype),
            grid_spec=pl.GridSpec(
                grid=grid,
                in_specs=[pl.BlockSpec((tm, _LANES), lambda i: (i, 0))],
                out_specs=pl.BlockSpec((tm, _LANES), lambda i: (i, 0)),
            ),
            compiler_params=_compiler_params(block_bytes),
            cost_estimate=_cost(n_bytes),
        )(x2d)
        return out2d.reshape(x.shape)

    if n_bytes <= _SMALL_RAGGED_BYTES:
        # Small ragged array (x.size not a multiple of 128): a single
        # full-array block — no pad, no output slice, no divisibility rule.
        return pl.pallas_call(
            _copy_kernel,
            out_shape=jax.ShapeDtypeStruct(x.shape, x.dtype),
            compiler_params=_compiler_params(n_bytes, parallel_axes=0),
            cost_estimate=_cost(n_bytes),
        )(x)

    # Large ragged array (rare for this module): chunked 1-D copy.  The chunk is
    # a multiple of 8*128 elements; Pallas masks the final partial block's
    # writes, so no padding is ever materialized in HBM.
    chunk = max(
        8 * _LANES,
        (_TARGET_BLOCK_BYTES // itemsize) // (8 * _LANES) * (8 * _LANES),
    )
    flat = x.reshape(-1)
    block_bytes = chunk * itemsize
    out_flat = pl.pallas_call(
        _copy_kernel,
        out_shape=jax.ShapeDtypeStruct((n,), x.dtype),
        grid_spec=pl.GridSpec(
            grid=(pl.cdiv(n, chunk),),
            in_specs=[pl.BlockSpec((chunk,), lambda i: (i,))],
            out_specs=pl.BlockSpec((chunk,), lambda i: (i,)),
        ),
        compiler_params=_compiler_params(block_bytes),
        cost_estimate=_cost(n_bytes),
    )(flat)
    return out_flat.reshape(x.shape)


if __name__ == "__main__":
    # Primary example input (small, consistent with the module's pass-through).
    x = jax.random.normal(jax.random.PRNGKey(0), (2, 4, 16, 16), dtype=jnp.float32)
    out = identity_map(x)
    jax.block_until_ready(out)
    assert out.shape == x.shape and out.dtype == x.dtype
    assert jnp.array_equal(out, x), "identity kernel must return x exactly"

    # Multi-block path with a ragged final block (rows=1030 -> tm=520, grid=2).
    y = jax.random.normal(jax.random.PRNGKey(1), (1030, 128), dtype=jnp.float32)
    out_y = identity_map(y)
    jax.block_until_ready(out_y)
    assert jnp.array_equal(out_y, y), "identity kernel must return y exactly"

    # Lane-dense bf16 multi-block path (rows=8192 -> 2 parallel grid steps).
    z = jax.random.normal(jax.random.PRNGKey(2), (4, 2048, 128), dtype=jnp.bfloat16)
    out_z = identity_map(z)
    jax.block_until_ready(out_z)
    assert out_z.dtype == z.dtype and jnp.array_equal(out_z, z)

    # Small ragged size (not a multiple of 128): single full-array block,
    # no host-side pad / slice passes.
    w = jax.random.normal(jax.random.PRNGKey(3), (3, 5, 7), dtype=jnp.bfloat16)
    out_w = identity_map(w)
    jax.block_until_ready(out_w)
    assert out_w.shape == w.shape and out_w.dtype == w.dtype
    assert jnp.array_equal(out_w, w), "identity kernel must return w exactly"

    print("KERNEL_OK")
</pallas_src>

<mosaic_0001>
module attributes {stable_mosaic.version = 11 : i64} {
  func.func @_copy_kernel(%arg0: i32, %arg1: memref<16x128xf32, #tpu.memory_space<vmem>>, %arg2: memref<16x128xf32, #tpu.memory_space<vmem>>) attributes {dimension_semantics = [#tpu.dimension_semantics<parallel>], iteration_bounds = array<i64: 1>, scalar_prefetch = 0 : i64, scratch_operands = 0 : i64, tpu.core_type = #tpu.core_type<tc>, window_params = [{transform_indices = @transform_0, window_bounds = array<i64: 16, 128>}, {transform_indices = @transform_1, window_bounds = array<i64: 16, 128>}]} {
    %c0 = arith.constant 0 : index
    %c0_0 = arith.constant 0 : index
    %0 = vector.load %arg1[%c0, %c0_0] : memref<16x128xf32, #tpu.memory_space<vmem>>, vector<16x128xf32>
    %c0_1 = arith.constant 0 : index
    %c0_2 = arith.constant 0 : index
    %1 = vector.load %arg2[%c0_1, %c0_2] : memref<16x128xf32, #tpu.memory_space<vmem>>, vector<16x128xf32>
    tpu.vector_store %arg2[%c0_1, %c0_2], %0 {strides = array<i32>} : memref<16x128xf32, #tpu.memory_space<vmem>>, vector<16x128xf32>,
    return
  }
  func.func @transform_0(%arg0: i32) -> (i32, i32) {
    %c0_i32 = arith.constant 0 : i32
    %c0_i32_0 = arith.constant 0 : i32
    return %arg0, %c0_i32 : i32, i32
  }
  func.func @transform_1(%arg0: i32) -> (i32, i32) {
    %c0_i32 = arith.constant 0 : i32
    %c0_i32_0 = arith.constant 0 : i32
    return %arg0, %c0_i32 : i32, i32
  }
}

</mosaic_0001>

<llo_original>
// kernel: identity_map.1
$region0: #{identity_map.1}
  #allocation0 [shape = 'u32[]', space=smem, size = 0x4, offset = 0x4, fixed_abs, tag = 'smem constant byte address 0x4 - core index']
  #allocation1 [shape = 'u32[144,128]{1,0:T(1,128)}', space=vmem, size = 0x12000, scoped, tag = 'internal scratch']
  %s0 = inlined_call_operand.vmem [shape: f32[16,128], index: 0, kind: input, shape index: {}]
  %s1 = inlined_call_operand.vmem [shape: f32[16,128], index: 1, kind: output, shape index: {}]
  %s2 = sld [smem:[#allocation0]]
  $region14: #{identity_map.1} parent=0
    _
  %s4 = ssub.s32 1, %s2
  %s5 = scalar_select 0, %s4, %s2
  // Predicated region
  $region2: #{identity_map.1} parent=0 // pred_check
    _
  $region3: #{identity_map.1} parent=0 // pred_check_branch
    %7 = sbr.rel (0) target = $region5
  $region4: #{identity_map.1} parent=0 // pred_region
    _
  $region5: #{identity_map.1} parent=0 // pred_fallthru
    _
  %v8 = vld [vmem:[%s0] sm:$0xff]
  %v9 = vld [vmem:[%s0 + $0x8] sm:$0xff]
  %10 = vst [vmem:[%s1] sm:$0xff] %v8
  %11 = vst [vmem:[%s1 + $0x8] sm:$0xff] %v9
  // Predicated region
  $region6: #{identity_map.1} parent=0 // pred_check
    _
  $region7: #{identity_map.1} parent=0 // pred_check_branch
    %13 = sbr.rel (0) target = $region9
  $region8: #{identity_map.1} parent=0 // pred_region
    _
  $region9: #{identity_map.1} parent=0 // pred_fallthru
    _
  // Predicated region
  $region10: #{identity_map.1} parent=0 // pred_check
    _
  $region11: #{identity_map.1} parent=0 // pred_check_branch
    %15 = sbr.rel (0) target = $region13
  $region12: #{identity_map.1} parent=0 // pred_region
    _
  $region13: #{identity_map.1} parent=0 // pred_fallthru
    _

</llo_original>
